<compile_context>
chip_gen: v7x
topology: tpu7x:2x2x1
jax: 0.10.0
libtpu: 0.0.40
codegen_flags: <defaults>
</compile_context>

<pallas_src>
import functools

import jax
import jax.numpy as jnp
from jax import lax
from jax.experimental import pallas as pl
from jax.experimental.pallas import tpu as pltpu

_EPS = 1e-12  # F.normalize default eps


def _decoder_kernel(x_ref, p_ref, o_ref, s_ref, *, k, nq, c, c_pad, mxu_dtype,
                    n_split, n_f_local, f_tile, f_total, mask_remainder):
    """One (parallel-slot, F-tile) step of the cross-attention decoder.

    x_ref: (1, C, F_TILE)  raw input features (native dtype)
    p_ref: (Q, C)          L2-normalized cluster prototypes
    o_ref: (1, Q, C_pad)   f32 output block, resident across the F axis
    s_ref: (Q, F_TILE)     f32 scratch holding the score tile (row-indexed)
    """
    f_local = pl.program_id(1)

    @pl.when(f_local == 0)
    def _init():
        o_ref[...] = jnp.zeros_like(o_ref)

    x = x_ref[0]                                              # (C, Ft) native
    if mask_remainder:
        # Zero OOB spatial columns of the (possibly partial) remainder tile so
        # neither matmul can pick up garbage/NaN from the padded DMA region.
        split = pl.program_id(0) % n_split if n_split > 1 else 0
        blk = split * n_f_local + f_local                     # global F block
        col = lax.broadcasted_iota(jnp.int32, (1, f_tile), 1) + blk * f_tile
        x = jnp.where(col < f_total, x, jnp.zeros((), x.dtype))

    x32 = x.astype(jnp.float32)
    x_mx = x if x.dtype == mxu_dtype else x32.astype(mxu_dtype)

    # ---- F.normalize folded into the matmul scalings (per spatial column) --
    inv_norm = lax.rsqrt(
        jnp.maximum(jnp.sum(x32 * x32, axis=0, keepdims=True),
                    jnp.float32(_EPS * _EPS)))                # (1, Ft), EUP

    # ---- scores: einsum('qc,cf->qf') on the MXU, scaled after f32 accum ----
    s = jnp.dot(p_ref[...], x_mx, preferred_element_type=jnp.float32)
    s = s * inv_norm                                          # (Q, Ft) f32

    # ---- torch.kthvalue(s, k, dim=Q) via streamed rank counting ------------
    # Loop over the Q rows, accumulating per-column < / > counts; no (Q,Q,Ft)
    # intermediate, exact tie handling.
    s_ref[...] = s

    def _count(b, carry):
        less, greater = carry
        row = s_ref[pl.ds(b, 1), :]                           # (1, Ft)
        less = less + (row < s).astype(jnp.int32)
        greater = greater + (row > s).astype(jnp.int32)
        return less, greater

    zeros_i = jnp.zeros(s.shape, jnp.int32)
    less, greater = lax.fori_loop(0, nq, _count, (zeros_i, zeros_i),
                                  unroll=nq if nq <= 32 else 8)
    leq = nq - greater                                        # #{b: s[b] <= s[a]}
    is_kth = jnp.logical_and(less < k, leq >= k)
    neg_inf = jnp.float32(-jnp.inf)
    kth_val = jnp.max(jnp.where(is_kth, s, neg_inf), axis=0, keepdims=True)

    # ---- masked softmax over the Q axis ------------------------------------
    logits = jnp.where(s < kth_val, neg_inf, s)
    m = jnp.max(logits, axis=0, keepdims=True)
    e = jnp.exp(logits - m)
    denom = jnp.sum(e, axis=0, keepdims=True)
    # Fold the column normalization into the softmax scale (EUP reciprocal).
    attn_scaled = e * (pl.reciprocal(denom, approx=True) * inv_norm)

    # ---- partial update: einsum('qf,cf->qc'), contracting the lane axis ----
    part = lax.dot_general(attn_scaled.astype(mxu_dtype), x_mx,
                           dimension_numbers=(((1,), (1,)), ((), ())),
                           preferred_element_type=jnp.float32)  # (Q, C)

    if c_pad == c:
        o_ref[0] += part                   # full-width lane-dense accumulate
    else:
        o_ref[0, :, :c] += part            # cheap masked accumulate (small Q)


def _vmem_capacity_bytes():
    try:
        cap = getattr(pltpu.get_tpu_info(), "vmem_capacity_bytes", None)
        if cap:
            return int(cap)
    except Exception:
        pass
    return 64 << 20                         # conservative (v7x per-TC VMEM)


def _pick_f_tile(f_dim, c, q, x_itemsize, budget_bytes):
    """Pick the F (lane) tile size: 128-multiples, exact divisors preferred."""
    if f_dim <= 128:
        return f_dim                        # full-extent block, always legal
    # Per-lane working set: double-buffered native x tile + one f32 copy for
    # the norm sum + ~10 Q-sized f32/int32 rows (scores, counts, exp, attn).
    per_lane = 2 * c * x_itemsize + 4 * c + 10 * q * 4
    cap = max(128, (budget_bytes // per_lane) // 128 * 128)
    cap = min(cap, 4096)                    # bound vreg pressure / step latency
    if f_dim % 128 == 0:
        best, t = 128, 256
        while t <= min(f_dim, cap):
            if f_dim % t == 0:
                best = t
            t += 128
        return best
    # F not a multiple of 128: small F -> one full-extent block; large F ->
    # bounded 128-multiple tiles with a masked remainder tile (cdiv grid).
    return f_dim if f_dim <= cap else cap


def cross_attention_decoder(input_features_nchw, query_weight, k_ratio=1.0,
                            *, f_tile=None):
    """JAX/Pallas equivalent of CrossAttentionDecoder.forward.

    input_features_nchw: (B, C, H, W)  (any float dtype; streamed natively)
    query_weight:        (Q, C)        nn.Embedding weight
    returns:             (B, Q, C) float32
    """
    B, C, H, W = input_features_nchw.shape
    f_total = H * W
    Q, Cw = query_weight.shape
    assert Cw == C, "hidden_dim of queries must match channel dim"

    k = int(Q * k_ratio) + 1
    assert 1 <= k <= Q, f"k={k} out of range for Q={Q} (torch.kthvalue would raise)"

    x = input_features_nchw.reshape(B, C, f_total)

    # get_initial_queries: F.normalize over hidden dim (f32 math).
    qf = query_weight.astype(jnp.float32)
    p = qf * lax.rsqrt(jnp.maximum(jnp.sum(qf * qf, axis=1, keepdims=True),
                                   jnp.float32(_EPS * _EPS)))

    mxu_dtype = jnp.bfloat16 if x.dtype == jnp.bfloat16 else jnp.float32
    p = p.astype(mxu_dtype)

    c_pad = ((C + 127) // 128) * 128        # lane-dense output store

    vmem_cap = _vmem_capacity_bytes()
    tile_budget = min(vmem_cap // 4, 32 << 20)
    if f_tile is None:
        f_tile = _pick_f_tile(f_total, C, Q, x.dtype.itemsize, tile_budget)
    n_f = pl.cdiv(f_total, f_tile)

    # v7x: with B == 1 the batch axis can't feed both TensorCores; split the F
    # reduction 2-way on the parallel axis and sum the partials outside.
    n_split = 2 if (B == 1 and n_f >= 2 and n_f % 2 == 0) else 1
    n_f_local = n_f // n_split
    n_par = B * n_split
    mask_remainder = (f_total % f_tile) != 0

    # Scoped-VMEM budget: tiles + double-buffering + scratch + spill headroom,
    # clamped to 75% of this generation's physical VMEM.
    est = 2 * C * f_tile * x.dtype.itemsize          # x double buffer
    est += 2 * Q * C * p.dtype.itemsize              # prototypes
    est += 2 * Q * c_pad * 4                         # resident output block
    est += Q * f_tile * 4                            # score scratch
    est += (8 * Q + 2 * C) * f_tile * 4              # live intermediates
    vmem_limit = int(min(max(2 * est, 32 << 20), (vmem_cap * 3) // 4))

    if n_split == 1:
        x_map = lambda b, f: (b, 0, f)
        out_map = lambda b, f: (b, 0, 0)
    else:
        x_map = lambda par, f: (par // n_split, 0, (par % n_split) * n_f_local + f)
        out_map = lambda par, f: (par, 0, 0)
    p_map = lambda par, f: (0, 0)

    kernel = functools.partial(
        _decoder_kernel, k=k, nq=Q, c=C, c_pad=c_pad, mxu_dtype=mxu_dtype,
        n_split=n_split, n_f_local=n_f_local, f_tile=f_tile, f_total=f_total,
        mask_remainder=mask_remainder)

    out = pl.pallas_call(
        kernel,
        out_shape=jax.ShapeDtypeStruct((n_par, Q, c_pad), jnp.float32),
        grid_spec=pltpu.PrefetchScalarGridSpec(
            num_scalar_prefetch=0,
            grid=(n_par, n_f_local),
            in_specs=[
                pl.BlockSpec((1, C, f_tile), x_map),
                pl.BlockSpec((Q, C), p_map),
            ],
            out_specs=pl.BlockSpec((1, Q, c_pad), out_map),
            scratch_shapes=[pltpu.VMEM((Q, f_tile), jnp.float32)],
        ),
        compiler_params=pltpu.CompilerParams(
            dimension_semantics=("parallel", "arbitrary"),
            vmem_limit_bytes=vmem_limit),
    )(x, p)

    if n_split > 1:
        out = out.reshape(B, n_split, Q, c_pad).sum(axis=1)
    return out[:, :, :C]


def _reference(input_features_nchw, query_weight, k_ratio):
    """Pure-JAX reference mirroring the PyTorch code (for verification)."""
    B, C, H, W = input_features_nchw.shape
    x = input_features_nchw.astype(jnp.float32)
    x = x / jnp.maximum(jnp.sqrt(jnp.sum(x * x, axis=1, keepdims=True)), _EPS)
    x = x.reshape(B, C, H * W)                                       # (B,C,F)
    q = query_weight.astype(jnp.float32)
    q = q / jnp.maximum(jnp.sqrt(jnp.sum(q * q, axis=1, keepdims=True)), _EPS)
    qb = jnp.broadcast_to(q[None], (B,) + q.shape)                   # (B,Q,C)
    s = jnp.einsum('bqc,bcf->bqf', qb, x)                            # (B,Q,F)
    Q = q.shape[0]
    k = int(Q * k_ratio) + 1
    kth = jnp.sort(s, axis=1)[:, k - 1:k, :]                         # kthvalue
    logits = jnp.where(s - kth < 0, -jnp.inf, s)
    attn = jax.nn.softmax(logits, axis=1)
    return jnp.einsum('bqf,bcf->bqc', attn, x)


if __name__ == "__main__":
    key = jax.random.PRNGKey(0)
    kx, kq, kx2, kq2 = jax.random.split(key, 4)

    # Test 1: batch=2, hidden_dim=channels=32, spatial 16x16 (F=256), Q=8.
    B, C, H, W, NQ = 2, 32, 16, 16, 8
    K_RATIO = 0.5  # default k_ratio=1 would make torch.kthvalue raise (k=Q+1)
    x = jax.random.normal(kx, (B, C, H, W), dtype=jnp.float32)
    query_weight = jax.random.normal(kq, (NQ, C), dtype=jnp.float32)  # N(0,1)
    out = jax.block_until_ready(
        cross_attention_decoder(x, query_weight, k_ratio=K_RATIO))
    ref = _reference(x, query_weight, K_RATIO)
    assert out.shape == (B, NQ, C)
    err = float(jnp.max(jnp.abs(out - ref)))
    assert err < 5e-3, f"test1 mismatch vs reference: max abs err {err}"

    # Test 2: batch=1, ragged F (13x13=169, not a multiple of 128) with a
    # forced 128-lane tile -> exercises the masked remainder tile and the
    # 2-way core split of the F reduction (v7x both-TensorCore path).
    B2, H2, W2 = 1, 13, 13
    x2 = jax.random.normal(kx2, (B2, C, H2, W2), dtype=jnp.float32)
    query_weight2 = jax.random.normal(kq2, (NQ, C), dtype=jnp.float32)
    out2 = jax.block_until_ready(
        cross_attention_decoder(x2, query_weight2, k_ratio=0.25, f_tile=128))
    ref2 = _reference(x2, query_weight2, 0.25)
    assert out2.shape == (B2, NQ, C)
    err2 = float(jnp.max(jnp.abs(out2 - ref2)))
    assert err2 < 5e-3, f"test2 mismatch vs reference: max abs err {err2}"

    print("KERNEL_OK")
</pallas_src>

<mosaic_0001>
module attributes {stable_mosaic.version = 11 : i64} {
  func.func @_decoder_kernel(%arg0: i32, %arg1: i32, %arg2: memref<1x32x256xf32, #tpu.memory_space<vmem>>, %arg3: memref<8x32xf32, #tpu.memory_space<vmem>>, %arg4: memref<1x8x128xf32, #tpu.memory_space<vmem>>, %arg5: memref<8x256xf32, #tpu.memory_space<vmem>>) attributes {dimension_semantics = [#tpu.dimension_semantics<parallel>, #tpu.dimension_semantics<arbitrary>], iteration_bounds = array<i64: 2, 1>, scalar_prefetch = 0 : i64, scratch_operands = 1 : i64, tpu.core_type = #tpu.core_type<tc>, window_params = [{transform_indices = @transform_0, window_bounds = array<i64: 1, 32, 256>}, {pipeline_mode = #tpu.pipeline_mode<synchronous>, transform_indices = @transform_1, window_bounds = array<i64: 8, 32>}, {transform_indices = @transform_2, window_bounds = array<i64: 1, 8, 128>}]} {
    %c0_i32 = arith.constant 0 : i32
    %0 = arith.cmpi eq, %arg1, %c0_i32 : i32
    %1 = arith.extui %0 : i1 to i32
    %c0_i32_0 = arith.constant 0 : i32
    %2 = arith.cmpi ne, %1, %c0_i32_0 : i32
    scf.if %2 {
      %cst_34 = arith.constant 0.000000e+00 : f32
      %130 = vector.broadcast %cst_34 : f32 to vector<1x8x128xf32>
      %c0_35 = arith.constant 0 : index
      %c0_36 = arith.constant 0 : index
      %c0_37 = arith.constant 0 : index
      %131 = vector.load %arg4[%c0_35, %c0_36, %c0_37] : memref<1x8x128xf32, #tpu.memory_space<vmem>>, vector<1x8x128xf32>
      tpu.vector_store %arg4[%c0_35, %c0_36, %c0_37], %130 {strides = array<i32>} : memref<1x8x128xf32, #tpu.memory_space<vmem>>, vector<1x8x128xf32>,
    } else {
    }
    %c0 = arith.constant 0 : index
    %c0_1 = arith.constant 0 : index
    %c0_2 = arith.constant 0 : index
    %3 = vector.load %arg2[%c0, %c0_1, %c0_2] : memref<1x32x256xf32, #tpu.memory_space<vmem>>, vector<1x32x256xf32>
    %4 = vector.shape_cast %3 : vector<1x32x256xf32> to vector<32x256xf32>
    %5 = arith.mulf %4, %4 : vector<32x256xf32>
    %cst = arith.constant dense<0.000000e+00> : vector<256xf32>
    %6 = vector.multi_reduction <add>, %5, %cst [0] : vector<32x256xf32> to vector<256xf32>
    %7 = vector.shape_cast %6 : vector<256xf32> to vector<1x256xf32>
    %cst_3 = arith.constant 1.000000e-24 : f32
    %8 = vector.broadcast %cst_3 : f32 to vector<1x256xf32>
    %9 = arith.maximumf %7, %8 : vector<1x256xf32>
    %10 = math.rsqrt %9 : vector<1x256xf32>
    %c0_4 = arith.constant 0 : index
    %c0_5 = arith.constant 0 : index
    %11 = vector.load %arg3[%c0_4, %c0_5] : memref<8x32xf32, #tpu.memory_space<vmem>>, vector<8x32xf32>
    %cst_6 = arith.constant dense<0.000000e+00> : vector<8x256xf32>
    %12 = tpu.matmul %11, %4, %cst_6 {dimension_numbers = #tpu.dot_dimension_numbers<[1], [0], [0], [1], [0, 0, 1, 1], [], []>} : vector<8x32xf32>, vector<32x256xf32>, vector<8x256xf32> -> vector<8x256xf32>
    %13 = vector.broadcast %10 : vector<1x256xf32> to vector<8x256xf32>
    %14 = arith.mulf %12, %13 : vector<8x256xf32>
    %c0_7 = arith.constant 0 : index
    %c0_8 = arith.constant 0 : index
    %15 = vector.load %arg5[%c0_7, %c0_8] : memref<8x256xf32, #tpu.memory_space<vmem>>, vector<8x256xf32>
    tpu.vector_store %arg5[%c0_7, %c0_8], %14 {strides = array<i32>} : memref<8x256xf32, #tpu.memory_space<vmem>>, vector<8x256xf32>,
    %c0_i32_9 = arith.constant 0 : i32
    %16 = vector.broadcast %c0_i32_9 : i32 to vector<8x256xi32>
    %c0_i32_10 = arith.constant 0 : i32
    %17 = arith.index_cast %c0_i32_10 : i32 to index
    %c0_11 = arith.constant 0 : index
    %18 = vector.load %arg5[%17, %c0_11] : memref<8x256xf32, #tpu.memory_space<vmem>>, vector<1x256xf32>
    %19 = vector.broadcast %18 : vector<1x256xf32> to vector<8x256xf32>
    %20 = arith.cmpf olt, %19, %14 : vector<8x256xf32>
    %21 = arith.extui %20 : vector<8x256xi1> to vector<8x256xi32>
    %22 = arith.addi %16, %21 : vector<8x256xi32>
    %23 = vector.broadcast %18 : vector<1x256xf32> to vector<8x256xf32>
    %24 = arith.cmpf ogt, %23, %14 : vector<8x256xf32>
    %25 = arith.extui %24 : vector<8x256xi1> to vector<8x256xi32>
    %26 = arith.addi %16, %25 : vector<8x256xi32>
    %c1_i32 = arith.constant 1 : i32
    %27 = arith.index_cast %c1_i32 : i32 to index
    %c0_12 = arith.constant 0 : index
    %28 = vector.load %arg5[%27, %c0_12] : memref<8x256xf32, #tpu.memory_space<vmem>>, vector<1x256xf32>
    %29 = vector.broadcast %28 : vector<1x256xf32> to vector<8x256xf32>
    %30 = arith.cmpf olt, %29, %14 : vector<8x256xf32>
    %31 = arith.extui %30 : vector<8x256xi1> to vector<8x256xi32>
    %32 = arith.addi %22, %31 : vector<8x256xi32>
    %33 = vector.broadcast %28 : vector<1x256xf32> to vector<8x256xf32>
    %34 = arith.cmpf ogt, %33, %14 : vector<8x256xf32>
    %35 = arith.extui %34 : vector<8x256xi1> to vector<8x256xi32>
    %36 = arith.addi %26, %35 : vector<8x256xi32>
    %c2_i32 = arith.constant 2 : i32
    %37 = arith.index_cast %c2_i32 : i32 to index
    %c0_13 = arith.constant 0 : index
    %38 = vector.load %arg5[%37, %c0_13] : memref<8x256xf32, #tpu.memory_space<vmem>>, vector<1x256xf32>
    %39 = vector.broadcast %38 : vector<1x256xf32> to vector<8x256xf32>
    %40 = arith.cmpf olt, %39, %14 : vector<8x256xf32>
    %41 = arith.extui %40 : vector<8x256xi1> to vector<8x256xi32>
    %42 = arith.addi %32, %41 : vector<8x256xi32>
    %43 = vector.broadcast %38 : vector<1x256xf32> to vector<8x256xf32>
    %44 = arith.cmpf ogt, %43, %14 : vector<8x256xf32>
    %45 = arith.extui %44 : vector<8x256xi1> to vector<8x256xi32>
    %46 = arith.addi %36, %45 : vector<8x256xi32>
    %c3_i32 = arith.constant 3 : i32
    %47 = arith.index_cast %c3_i32 : i32 to index
    %c0_14 = arith.constant 0 : index
    %48 = vector.load %arg5[%47, %c0_14] : memref<8x256xf32, #tpu.memory_space<vmem>>, vector<1x256xf32>
    %49 = vector.broadcast %48 : vector<1x256xf32> to vector<8x256xf32>
    %50 = arith.cmpf olt, %49, %14 : vector<8x256xf32>
    %51 = arith.extui %50 : vector<8x256xi1> to vector<8x256xi32>
    %52 = arith.addi %42, %51 : vector<8x256xi32>
    %53 = vector.broadcast %48 : vector<1x256xf32> to vector<8x256xf32>
    %54 = arith.cmpf ogt, %53, %14 : vector<8x256xf32>
    %55 = arith.extui %54 : vector<8x256xi1> to vector<8x256xi32>
    %56 = arith.addi %46, %55 : vector<8x256xi32>
    %c4_i32 = arith.constant 4 : i32
    %57 = arith.index_cast %c4_i32 : i32 to index
    %c0_15 = arith.constant 0 : index
    %58 = vector.load %arg5[%57, %c0_15] : memref<8x256xf32, #tpu.memory_space<vmem>>, vector<1x256xf32>
    %59 = vector.broadcast %58 : vector<1x256xf32> to vector<8x256xf32>
    %60 = arith.cmpf olt, %59, %14 : vector<8x256xf32>
    %61 = arith.extui %60 : vector<8x256xi1> to vector<8x256xi32>
    %62 = arith.addi %52, %61 : vector<8x256xi32>
    %63 = vector.broadcast %58 : vector<1x256xf32> to vector<8x256xf32>
    %64 = arith.cmpf ogt, %63, %14 : vector<8x256xf32>
    %65 = arith.extui %64 : vector<8x256xi1> to vector<8x256xi32>
    %66 = arith.addi %56, %65 : vector<8x256xi32>
    %c5_i32 = arith.constant 5 : i32
    %67 = arith.index_cast %c5_i32 : i32 to index
    %c0_16 = arith.constant 0 : index
    %68 = vector.load %arg5[%67, %c0_16] : memref<8x256xf32, #tpu.memory_space<vmem>>, vector<1x256xf32>
    %69 = vector.broadcast %68 : vector<1x256xf32> to vector<8x256xf32>
    %70 = arith.cmpf olt, %69, %14 : vector<8x256xf32>
    %71 = arith.extui %70 : vector<8x256xi1> to vector<8x256xi32>
    %72 = arith.addi %62, %71 : vector<8x256xi32>
    %73 = vector.broadcast %68 : vector<1x256xf32> to vector<8x256xf32>
    %74 = arith.cmpf ogt, %73, %14 : vector<8x256xf32>
    %75 = arith.extui %74 : vector<8x256xi1> to vector<8x256xi32>
    %76 = arith.addi %66, %75 : vector<8x256xi32>
    %c6_i32 = arith.constant 6 : i32
    %77 = arith.index_cast %c6_i32 : i32 to index
    %c0_17 = arith.constant 0 : index
    %78 = vector.load %arg5[%77, %c0_17] : memref<8x256xf32, #tpu.memory_space<vmem>>, vector<1x256xf32>
    %79 = vector.broadcast %78 : vector<1x256xf32> to vector<8x256xf32>
    %80 = arith.cmpf olt, %79, %14 : vector<8x256xf32>
    %81 = arith.extui %80 : vector<8x256xi1> to vector<8x256xi32>
    %82 = arith.addi %72, %81 : vector<8x256xi32>
    %83 = vector.broadcast %78 : vector<1x256xf32> to vector<8x256xf32>
    %84 = arith.cmpf ogt, %83, %14 : vector<8x256xf32>
    %85 = arith.extui %84 : vector<8x256xi1> to vector<8x256xi32>
    %86 = arith.addi %76, %85 : vector<8x256xi32>
    %c7_i32 = arith.constant 7 : i32
    %87 = arith.index_cast %c7_i32 : i32 to index
    %c0_18 = arith.constant 0 : index
    %88 = vector.load %arg5[%87, %c0_18] : memref<8x256xf32, #tpu.memory_space<vmem>>, vector<1x256xf32>
    %89 = vector.broadcast %88 : vector<1x256xf32> to vector<8x256xf32>
    %90 = arith.cmpf olt, %89, %14 : vector<8x256xf32>
    %91 = arith.extui %90 : vector<8x256xi1> to vector<8x256xi32>
    %92 = arith.addi %82, %91 : vector<8x256xi32>
    %93 = vector.broadcast %88 : vector<1x256xf32> to vector<8x256xf32>
    %94 = arith.cmpf ogt, %93, %14 : vector<8x256xf32>
    %95 = arith.extui %94 : vector<8x256xi1> to vector<8x256xi32>
    %96 = arith.addi %86, %95 : vector<8x256xi32>
    %c8_i32 = arith.constant 8 : i32
    %c8_i32_19 = arith.constant 8 : i32
    %97 = vector.broadcast %c8_i32_19 : i32 to vector<8x256xi32>
    %98 = arith.subi %97, %96 : vector<8x256xi32>
    %c5_i32_20 = arith.constant 5 : i32
    %99 = vector.broadcast %c5_i32_20 : i32 to vector<8x256xi32>
    %100 = arith.cmpi slt, %92, %99 : vector<8x256xi32>
    %c5_i32_21 = arith.constant 5 : i32
    %101 = vector.broadcast %c5_i32_21 : i32 to vector<8x256xi32>
    %102 = arith.cmpi sge, %98, %101 : vector<8x256xi32>
    %103 = arith.andi %100, %102 : vector<8x256xi1>
    %cst_22 = arith.constant 0xFF800000 : f32
    %104 = vector.broadcast %cst_22 : f32 to vector<8x256xf32>
    %105 = arith.select %103, %14, %104 : vector<8x256xi1>, vector<8x256xf32>
    %cst_23 = arith.constant dense<0xFF800000> : vector<256xf32>
    %106 = vector.multi_reduction <maximumf>, %105, %cst_23 [0] : vector<8x256xf32> to vector<256xf32>
    %107 = vector.shape_cast %106 : vector<256xf32> to vector<1x256xf32>
    %108 = vector.broadcast %107 : vector<1x256xf32> to vector<8x256xf32>
    %109 = arith.cmpf olt, %14, %108 : vector<8x256xf32>
    %cst_24 = arith.constant 0xFF800000 : f32
    %110 = vector.broadcast %cst_24 : f32 to vector<8x256xf32>
    %111 = arith.select %109, %110, %14 : vector<8x256xi1>, vector<8x256xf32>
    %cst_25 = arith.constant dense<0xFF800000> : vector<256xf32>
    %112 = vector.multi_reduction <maximumf>, %111, %cst_25 [0] : vector<8x256xf32> to vector<256xf32>
    %113 = vector.shape_cast %112 : vector<256xf32> to vector<1x256xf32>
    %114 = vector.broadcast %113 : vector<1x256xf32> to vector<8x256xf32>
    %115 = arith.subf %111, %114 : vector<8x256xf32>
    %116 = math.exp %115 : vector<8x256xf32>
    %cst_26 = arith.constant dense<0.000000e+00> : vector<256xf32>
    %117 = vector.multi_reduction <add>, %116, %cst_26 [0] : vector<8x256xf32> to vector<256xf32>
    %118 = vector.shape_cast %117 : vector<256xf32> to vector<1x256xf32>
    %119 = tpu.reciprocal %118 {approx = true} : vector<1x256xf32> -> vector<1x256xf32>
    %120 = arith.mulf %119, %10 : vector<1x256xf32>
    %121 = vector.broadcast %120 : vector<1x256xf32> to vector<8x256xf32>
    %122 = arith.mulf %116, %121 : vector<8x256xf32>
    %cst_27 = arith.constant dense<0.000000e+00> : vector<8x32xf32>
    %123 = tpu.matmul %122, %4, %cst_27 {dimension_numbers = #tpu.dot_dimension_numbers<[1], [1], [0], [0], [0, 0, 1, 0], [], []>} : vector<8x256xf32>, vector<32x256xf32>, vector<8x32xf32> -> vector<8x32xf32>
    %c0_28 = arith.constant 0 : index
    %c0_29 = arith.constant 0 : index
    %c0_30 = arith.constant 0 : index
    %124 = vector.load %arg4[%c0_28, %c0_29, %c0_30] : memref<1x8x128xf32, #tpu.memory_space<vmem>>, vector<1x8x32xf32>
    %125 = vector.shape_cast %124 : vector<1x8x32xf32> to vector<8x32xf32>
    %126 = arith.addf %125, %123 : vector<8x32xf32>
    %c0_31 = arith.constant 0 : index
    %c0_32 = arith.constant 0 : index
    %c0_33 = arith.constant 0 : index
    %127 = vector.load %arg4[%c0_31, %c0_32, %c0_33] : memref<1x8x128xf32, #tpu.memory_space<vmem>>, vector<1x8x32xf32>
    %128 = vector.shape_cast %127 : vector<1x8x32xf32> to vector<8x32xf32>
    %129 = vector.shape_cast %126 : vector<8x32xf32> to vector<1x8x32xf32>
    tpu.vector_store %arg4[%c0_31, %c0_32, %c0_33], %129 {strides = array<i32>} : memref<1x8x128xf32, #tpu.memory_space<vmem>>, vector<1x8x32xf32>,
    return
  }
  func.func @transform_0(%arg0: i32, %arg1: i32) -> (i32, i32, i32) {
    %c0_i32 = arith.constant 0 : i32
    %c0_i32_0 = arith.constant 0 : i32
    return %arg0, %c0_i32, %arg1 : i32, i32, i32
  }
  func.func @transform_1(%arg0: i32, %arg1: i32) -> (i32, i32) {
    %c0_i32 = arith.constant 0 : i32
    %c0_i32_0 = arith.constant 0 : i32
    %c0_i32_1 = arith.constant 0 : i32
    return %c0_i32, %c0_i32_0 : i32, i32
  }
  func.func @transform_2(%arg0: i32, %arg1: i32) -> (i32, i32, i32) {
    %c0_i32 = arith.constant 0 : i32
    %c0_i32_0 = arith.constant 0 : i32
    %c0_i32_1 = arith.constant 0 : i32
    return %arg0, %c0_i32, %c0_i32_0 : i32, i32, i32
  }
}

</mosaic_0001>

<llo_original>
// kernel: tpu_custom_call.1
$region0: #{tpu_custom_call.1}
  #allocation0 [shape = 'u32[]', space=smem, size = 0x4, offset = 0x4, fixed_abs, tag = 'smem constant byte address 0x4 - core index']
  #allocation1 [shape = 'u32[144,128]{1,0:T(1,128)}', space=vmem, size = 0x12000, scoped, tag = 'internal scratch']
  #allocation2 [shape = 'f32[8,256]{1,0:T(8,128)}', space=vmem, size = 0x2000, scoped, tag = 'scratch operand']
  %s0 = inlined_call_operand.hbm [shape: f32[2,32,256], index: 0, kind: input, shape index: {}]
  %s1 = inlined_call_operand.hbm [shape: f32[8,32], index: 1, kind: input, shape index: {}]
  %s2 = inlined_call_operand.hbm [shape: f32[2,8,128], index: 2, kind: output, shape index: {}]
  %s3 = sld [smem:[#allocation0]]
  $region53: #{tpu_custom_call.1} parent=0
    _
  %s5 = ssub.s32 1, %s3
  %s6 = scalar_select 0, %s5, %s3
  $region1: #{tpu_custom_call.1} parent=0
    #allocation3 [shape = 'u8[65536]{0}', space=vmem, size = 0x10000, scoped, tag = 'input window, operand 0']
    #allocation4 [shape = 's32[2]{0}', space=sflag, size = 0x8, scoped, tag = 'scoped memory for tpu_custom_call.1']
    #allocation5 [shape = 's32[2]{0}', space=sflag, size = 0x8, scoped, tag = 'scoped memory for tpu_custom_call.1']
    #allocation6 [shape = 'u8[4096]{0}', space=vmem, size = 0x1000, scoped, tag = 'input window, operand 1, single buffered']
    #allocation7 [shape = 's32[1]{0}', space=sflag, size = 0x4, scoped, tag = 'scoped memory for tpu_custom_call.1']
    #allocation8 [shape = 'u8[8192]{0}', space=vmem, size = 0x2000, scoped, tag = 'output window, operand 0']
    %7 = vsyncpa [#allocation4], 0
    %s8 = scalar_lea.sflag [#allocation4], 1
    %9 = vsyncpa %s8, 0
    %10 = vsyncpa [#allocation7], 0
    %11 = vsyncpa [#allocation5], 0
    %s12 = scalar_lea.sflag [#allocation5], 1
    %13 = vsyncpa %s12, 0
    loop: start=0, step=1, limit=4
    $region2: #{tpu_custom_call.1} parent=1 // loop_pre_header
      _
    $region3: #{tpu_custom_call.1} parent=1 // loop_header
      %s15 = sphi 0, %s19
      %p16 = scmp.ge.s32.totalorder %s15, 4
      %s22 = sphi 0, %s34
      %s23 = sphi 0, %s30
      %s24 = sphi 0, %s22
      %s25 = sphi 0, %s23
      %s26 = sphi 0, %s24
      %s27 = sphi 0, %s25
      %s39 = sphi 0, %s41
      %s42 = sphi 0, %s39
      %s43 = sphi 0, %s42
      %s59 = sphi 0, %s43
      %s63 = sphi 0, %s63
      %s65 = sphi 0, %s63
      %s66 = sphi 0, %s65
      %s80 = sphi 0, %s66
      %s86 = sphi 0, %s88
      %s89 = sphi 0, %s86
      %s90 = sphi 0, %s89
      %s106 = sphi 0, %s90
    $region4: #{tpu_custom_call.1} parent=1 // loop_header_branch
      %18 = sbr.rel (%p16) target = $region8
    $region5: #{tpu_custom_call.1} parent=1 // loop_body
      %s20 = ssub.s32 %s15, 1
      %s21 = ssub.s32 %s15, 2
      %s28 = sadd.s32 1, %s23
      %p29 = scmp.ge.s32.totalorder %s28, 1
      %s30 = scalar_select %p29, 0, %s28
      %s31 = sadd.s32 1, %s22
      %s32 = scalar_select %p29, %s31, %s22
      %p33 = scmp.ge.s32.totalorder %s32, 2
      %s34 = scalar_select %p33, 0, %s32
      %s35 = ssub.s32 %s22, %s34
      %s36 = ssub.s32 %s23, %s30
      %s37 = sor.u32 %s35, %s36
      %p38 = scmp.eq.s32.totalorder %s37, 0
      %s40 = sadd.s32 %s39, 1
      %s41 = scalar_select %p38, %s39, %s40
      %p44 = pneg %p38
      %p45 = scmp.eq.s32.totalorder %s15, 1
      %p46 = por %p44, %p45
      %p47 = scmp.ne.s32.totalorder %s39, %s42
      %p48 = scmp.eq.s32.totalorder %s15, 0
      %p49 = por %p47, %p48
      %p50 = scmp.ne.s32.totalorder %s39, %s42
      %p51 = scmp.eq.s32.totalorder %s20, 1
      %p52 = por %p50, %p51
      %p53 = scmp.ne.s32.totalorder %s42, %s43
      %p54 = scmp.eq.s32.totalorder %s20, 0
      %p55 = por %p53, %p54
      %p56 = scmp.ne.s32.totalorder %s42, %s43
      %p57 = scmp.eq.s32.totalorder %s21, 1
      %p58 = por %p56, %p57
      %p60 = scmp.ne.s32.totalorder %s43, %s59
      %p61 = scmp.eq.s32.totalorder %s21, 0
      %p62 = por %p60, %p61
      %s64 = sadd.s32 %s63, 1
      %p67 = scmp.eq.s32.totalorder %s15, 1
      %p68 = scmp.ne.s32.totalorder %s63, %s65
      %p69 = scmp.eq.s32.totalorder %s15, 0
      %p70 = por %p68, %p69
      %p71 = scmp.ne.s32.totalorder %s63, %s65
      %p72 = scmp.eq.s32.totalorder %s20, 1
      %p73 = por %p71, %p72
      %p74 = scmp.ne.s32.totalorder %s65, %s66
      %p75 = scmp.eq.s32.totalorder %s20, 0
      %p76 = por %p74, %p75
      %p77 = scmp.ne.s32.totalorder %s65, %s66
      %p78 = scmp.eq.s32.totalorder %s21, 1
      %p79 = por %p77, %p78
      %p81 = scmp.ne.s32.totalorder %s66, %s80
      %p82 = scmp.eq.s32.totalorder %s21, 0
      %p83 = por %p81, %p82
      %s84 = ssub.s32 %s22, %s34
      %p85 = scmp.eq.s32.totalorder %s84, 0
      %s87 = sadd.s32 %s86, 1
      %s88 = scalar_select %p85, %s86, %s87
      %p91 = pneg %p85
      %p92 = scmp.eq.s32.totalorder %s15, 1
      %p93 = por %p91, %p92
      %p94 = scmp.ne.s32.totalorder %s86, %s89
      %p95 = scmp.eq.s32.totalorder %s15, 0
      %p96 = por %p94, %p95
      %p97 = scmp.ne.s32.totalorder %s86, %s89
      %p98 = scmp.eq.s32.totalorder %s20, 1
      %p99 = por %p97, %p98
      %p100 = scmp.ne.s32.totalorder %s89, %s90
      %p101 = scmp.eq.s32.totalorder %s20, 0
      %p102 = por %p100, %p101
      %p103 = scmp.ne.s32.totalorder %s89, %s90
      %p104 = scmp.eq.s32.totalorder %s21, 1
      %p105 = por %p103, %p104
      %p107 = scmp.ne.s32.totalorder %s90, %s106
      %p108 = scmp.eq.s32.totalorder %s21, 0
      %p109 = por %p107, %p108
      %p110 = scmp.le.s32.totalorder 1, %s15
      %p111 = scmp.lt.s32.totalorder %s15, 3
      %p112 = pnand %p110, %p111
      %p113 = pneg %p112
      // Predicated region
      $region9: #{tpu_custom_call.1} parent=5 // pred_check
        _
      $region10: #{tpu_custom_call.1} parent=5 // pred_check_branch
        %115 = sbr.rel (%p112) target = $region12
      $region11: #{tpu_custom_call.1} parent=5 // pred_region
        %s116 = ssub.s32 %s15, 1
        // Predicated region
        $region13: #{tpu_custom_call.1} parent=11 // pred_check
          %p117 = pneg %p76
        $region14: #{tpu_custom_call.1} parent=11 // pred_check_branch
          %119 = sbr.rel (%p117) target = $region16
        $region15: #{tpu_custom_call.1} parent=11 // pred_region
          %s121 = ssub.s32 128, 128
          %122 = vsyncadd [#allocation7], %s121
          %s124 = sshll.u32 [#allocation6], 4
          %s125 = int_to_ptr.vmem [resolvable:$true] %s124
          %127 = dma.hbm_to_vmem [thread:$0]  %s1, 128, %s125, [#allocation7]
        $region16: #{tpu_custom_call.1} parent=11 // pred_fallthru
          _
      $region12: #{tpu_custom_call.1} parent=5 // pred_fallthru
        _
      %p128 = scmp.lt.s32.totalorder %s15, 2
      // Predicated region
      $region17: #{tpu_custom_call.1} parent=5 // pred_check
        %p129 = pneg %p128
      $region18: #{tpu_custom_call.1} parent=5 // pred_check_branch
        %131 = sbr.rel (%p129) target = $region20
      $region19: #{tpu_custom_call.1} parent=5 // pred_region
        // Predicated region
        $region21: #{tpu_custom_call.1} parent=19 // pred_check
          %p132 = pneg %p49
        $region22: #{tpu_custom_call.1} parent=19 // pred_check_branch
          %134 = sbr.rel (%p132) target = $region24
        $region23: #{tpu_custom_call.1} parent=19 // pred_region
          %s135 = sand.u32 %s39, 1
          %s136 = scalar_lea.sflag [#allocation4], %s135
          %s137 = sand.u32 %s39, 1
          %s138 = smul.addr %s137, 64
          %s139 = scalar_lea.vmem [#allocation3], %s138
          %s140 = smul.u32 2, %s23
          %s142 = ssub.s32 1024, 1024
          %143 = vsyncadd %s136, %s142
          %s144 = smul.addr %s22, 8
          %s145 = sadd.s32 %s140, %s144
          %s146 = smul.addr %s145, 128
          %s147 = scalar_lea.hbm %s0, %s146
          %s148 = sshll.u32 %s139, 4
          %s149 = int_to_ptr.vmem [resolvable:$true] %s148
          %154 = dma.hbm_to_vmem [thread:$0]  %s147, 1024, %s149, %s136, 256, 256, 16
        $region24: #{tpu_custom_call.1} parent=19 // pred_fallthru
          _
      $region20: #{tpu_custom_call.1} parent=5 // pred_fallthru
        _
      %p155 = scmp.le.s32.totalorder 1, %s15
      %p156 = scmp.lt.s32.totalorder %s15, 3
      %p157 = pnand %p155, %p156
      %p158 = pneg %p157
      // Predicated region
      $region25: #{tpu_custom_call.1} parent=5 // pred_check
        _
      $region26: #{tpu_custom_call.1} parent=5 // pred_check_branch
        %160 = sbr.rel (%p157) target = $region28
      $region27: #{tpu_custom_call.1} parent=5 // pred_region
        %s161 = ssub.s32 %s15, 1
        %s162 = sand.u32 %s42, 1
        %s163 = scalar_lea.sflag [#allocation4], %s162
        %s164 = sand.u32 %s42, 1
        %s165 = smul.addr %s164, 64
        %s166 = scalar_lea.vmem [#allocation3], %s165
        // Predicated region
        $region29: #{tpu_custom_call.1} parent=27 // pred_check
          %p167 = pneg %p55
        $region30: #{tpu_custom_call.1} parent=27 // pred_check_branch
          %169 = sbr.rel (%p167) target = $region32
        $region31: #{tpu_custom_call.1} parent=27 // pred_region
          %170 = dma.done %s163, 1024
        $region32: #{tpu_custom_call.1} parent=27 // pred_fallthru
          _
        // Predicated region
        $region33: #{tpu_custom_call.1} parent=27 // pred_check
          %p171 = pneg %p76
        $region34: #{tpu_custom_call.1} parent=27 // pred_check_branch
          %173 = sbr.rel (%p171) target = $region36
        $region35: #{tpu_custom_call.1} parent=27 // pred_region
          %174 = dma.done [#allocation7], 128
        $region36: #{tpu_custom_call.1} parent=27 // pred_fallthru
          _
        %s175 = sand.u32 %s42, 1
        %s176 = scalar_lea.sflag [#allocation4], %s175
        %s177 = sand.u32 %s42, 1
        %s178 = smul.addr %s177, 64
        %s179 = scalar_lea.vmem [#allocation3], %s178
        %p180 = pneg %p55
        %p181 = pneg %p52
        %p182 = pneg %p76
        %p183 = pneg %p73
        %p184 = pneg %p102
        %p185 = pneg %p99
        %s186 = sand.u32 %s89, 1
        %s187 = scalar_lea.sflag [#allocation5], %s186
        %s188 = sand.u32 %s89, 1
        %s189 = smul.addr %s188, 8
        %s190 = scalar_lea.vmem [#allocation8], %s189
        %s191 = smul.u32 2, %s25
        %p192 = scmp.eq.s32.totalorder %s25, 0
        // Predicated region
        $region37: #{tpu_custom_call.1} parent=27 // pred_check
          %p193 = pneg %p192
        $region38: #{tpu_custom_call.1} parent=27 // pred_check_branch
          %195 = sbr.rel (%p193) target = $region40
        $region39: #{tpu_custom_call.1} parent=27 // pred_region
          %196 = vst [vmem:[%s190] sm:$0xff] 0.0
        $region40: #{tpu_custom_call.1} parent=27 // pred_fallthru
          _
        %v197 = vld [vmem:[%s166] sm:$0xff]
        %v198 = vld [vmem:[%s166 + $0x8] sm:$0xff]
        %v199 = vld [vmem:[%s166 + $0x10] sm:$0xff]
        %v200 = vld [vmem:[%s166 + $0x18] sm:$0xff]
        %v201 = vld [vmem:[%s166 + $0x20] sm:$0xff]
        %v202 = vld [vmem:[%s166 + $0x28] sm:$0xff]
        %v203 = vld [vmem:[%s166 + $0x30] sm:$0xff]
        %v204 = vld [vmem:[%s166 + $0x38] sm:$0xff]
        %v205 = vmul.f32 %v197, %v197
        %v206 = vmul.f32 %v198, %v198
        %v207 = vmul.f32 %v199, %v199
        %v208 = vmul.f32 %v200, %v200
        %v209 = vmul.f32 %v201, %v201
        %v210 = vmul.f32 %v202, %v202
        %v211 = vmul.f32 %v203, %v203
        %v212 = vmul.f32 %v204, %v204
        %v213 = vadd.f32 %v205, %v207
        %v214 = vadd.f32 %v213, %v209
        %v215 = vadd.f32 %v214, %v211
        %v216 = vrot.slane %v215, 4
        %v217 = vadd.f32 %v215, %v216
        %v218 = vrot.slane %v217, 2
        %v219 = vadd.f32 %v217, %v218
        %v220 = vrot.slane %v219, 1
        %v221 = vadd.f32 %v219, %v220
        %v222 = vadd.f32 %v206, %v208
        %v223 = vadd.f32 %v222, %v210
        %v224 = vadd.f32 %v223, %v212
        %v225 = vrot.slane %v224, 4
        %v226 = vadd.f32 %v224, %v225
        %v227 = vrot.slane %v226, 2
        %v228 = vadd.f32 %v226, %v227
        %v229 = vrot.slane %v228, 1
        %v230 = vadd.f32 %v228, %v229
        %v231 = vmax.f32 %v221, 1e-24
        %v232 = vmax.f32 %v230, 1e-24
        %v233 = vrsqrt.pop %v231
        %v234 = vrsqrt.pop %v232
        %v235 = vld [vmem:[#allocation6] sm:$0xff]
        %vm236 = vcmask 261120
        %v238 = vsel %vm236, %v235, 0
        %240 = vmatprep.subr.mxu0 %v198
        %241 = vmatpush1.msra.mxu0 %v197
        %242 = vmatprep.subr.mxu0 %v200
        %243 = vmatpush1.msra.mxu0 %v199
        %244 = vmatprep.subr.mxu0 %v202
        %245 = vmatpush1.msra.mxu0 %v201
        %246 = vmatprep.subr.mxu0 %v204
        %247 = vmatpush1.msra.mxu0 %v203
        %248 = vmatprep.subr.mxu0 0.0
        %249 = vmatpush1.msra.mxu0 0.0
        %250 = vmatprep.subr.mxu0 0.0
        %251 = vmatpush1.msra.mxu0 0.0
        %252 = vmatprep.subr.mxu0 0.0
        %253 = vmatpush1.msra.mxu0 0.0
        %254 = vmatprep.subr.mxu0 0.0
        %255 = vmatpush1.msra.mxu0 0.0
        %256 = vmatprep.subr.mxu0 0.0
        %257 = vmatpush1.msra.mxu0 0.0
        %258 = vmatprep.subr.mxu0 0.0
        %259 = vmatpush1.msra.mxu0 0.0
        %260 = vmatprep.subr.mxu0 0.0
        %261 = vmatpush1.msra.mxu0 0.0
        %262 = vmatprep.subr.mxu0 0.0
        %263 = vmatpush1.msra.mxu0 0.0
        %264 = vmatprep.subr.mxu0 0.0
        %265 = vmatpush1.msra.mxu0 0.0
        %266 = vmatprep.subr.mxu0 0.0
        %267 = vmatpush1.msra.mxu0 0.0
        %268 = vmatprep.subr.mxu0 0.0
        %269 = vmatpush1.msra.mxu0 0.0
        %270 = vmatprep.subr.mxu0 0.0
        %271 = vmatpush1.msra.mxu0 0.0
        %272 = vmatprep.subr.mxu0 0.0
        %273 = vmatpush1.msra.mxu0 0.0
        %274 = vmatprep.subr.mxu0 0.0
        %275 = vmatpush1.msra.mxu0 0.0
        %276 = vmatprep.subr.mxu0 0.0
        %277 = vmatpush1.msra.mxu0 0.0
        %278 = vmatprep.subr.mxu0 0.0
        %279 = vmatpush1.msra.mxu0 0.0
        %280 = vmatprep.subr.mxu0 0.0
        %281 = vmatpush1.msra.mxu0 0.0
        %282 = vmatprep.subr.mxu0 0.0
        %283 = vmatpush1.msra.mxu0 0.0
        %284 = vmatprep.subr.mxu0 0.0
        %285 = vmatpush1.msra.mxu0 0.0
        %286 = vmatprep.subr.mxu0 0.0
        %287 = vmatpush1.msra.mxu0 0.0
        %288 = vmatprep.subr.mxu0 0.0
        %289 = vmatpush1.msra.mxu0 0.0
        %290 = vmatprep.subr.mxu0 0.0
        %291 = vmatpush1.msra.mxu0 0.0
        %292 = vmatprep.subr.mxu0 0.0
        %293 = vmatpush1.msra.mxu0 0.0
        %294 = vmatprep.subr.mxu0 0.0
        %295 = vmatpush1.msra.mxu0 0.0
        %296 = vmatprep.subr.mxu0 0.0
        %297 = vmatpush1.msra.mxu0 0.0
        %298 = vmatprep.subr.mxu0 0.0
        %299 = vmatpush1.msra.mxu0 0.0
        %300 = vmatprep.subr.mxu0 0.0
        %301 = vmatpush1.msra.mxu0 0.0
        %302 = vmatprep.subr.mxu0 0.0
        %303 = vmatpush1.msra.mxu0 0.0
        %304 = vmatprep.mubr.f32.mxu0 0.0
        %305 = vmatmul.mubr.f32.gmra.mrb[0].mxu0 %v238
        %v306 = vpop.f32.mrb[0].mxu0
        %v307 = vadd.f32 0.0, %v306
        %v308 = vpop.f32.mrb[0].mxu0
        %v309 = vadd.f32 0.0, %v308
        %310 = vdwg.mxu0
        %v311 = vmul.f32 %v307, %v233
        %v312 = vmul.f32 %v309, %v234
        %313 = vst [vmem:[#allocation2] sm:$0xff] %v311
        %314 = vst [vmem:[#allocation2 + $0x8] sm:$0xff] %v312
        %v315 = vld [vmem:[#allocation2] ss:$8 sm:$0x3]
        %v317 = vlaneseq
        %v318 = vshrl.u32 %v317, 7
        %v319 = vsub.s32 0, %v318
        %v320 = vrot.slane %v315, %v319
        %v321 = vlaneseq
        %v322 = vshrl.u32 %v321, 7
        %v323 = vsub.s32 1, %v322
        %v324 = vrot.slane %v315, %v323
        %vm327 = vcmp.lt.f32.partialorder %v320, %v311
        %vm328 = vcmp.lt.f32.partialorder %v324, %v312
        %v329 = vsel %vm327, 1, 0
        %v330 = vsel %vm328, 1, 0
        %vm331 = vcmp.gt.f32.partialorder %v320, %v311
        %vm332 = vcmp.gt.f32.partialorder %v324, %v312
        %v333 = vsel %vm331, 1, 0
        %v334 = vsel %vm332, 1, 0
        %s335 = scalar_lea.vmem [#allocation2], 1
        %v336 = vld [vmem:[%s335] ss:$8 sm:$0x3]
        %v338 = vlaneseq
        %v339 = vshrl.u32 %v338, 7
        %v340 = vsub.s32 0, %v339
        %v341 = vrot.slane %v336, %v340
        %v342 = vlaneseq
        %v343 = vshrl.u32 %v342, 7
        %v344 = vsub.s32 1, %v343
        %v345 = vrot.slane %v336, %v344
        %vm348 = vcmp.lt.f32.partialorder %v341, %v311
        %vm349 = vcmp.lt.f32.partialorder %v345, %v312
        %v350 = vsel %vm348, 1, 0
        %v351 = vsel %vm349, 1, 0
        %v352 = vadd.s32 %v329, %v350
        %v353 = vadd.s32 %v330, %v351
        %vm354 = vcmp.gt.f32.partialorder %v341, %v311
        %vm355 = vcmp.gt.f32.partialorder %v345, %v312
        %v356 = vsel %vm354, 1, 0
        %v357 = vsel %vm355, 1, 0
        %v358 = vadd.s32 %v333, %v356
        %v359 = vadd.s32 %v334, %v357
        %s360 = scalar_lea.vmem [#allocation2], 2
        %v361 = vld [vmem:[%s360] ss:$8 sm:$0x3]
        %v363 = vlaneseq
        %v364 = vshrl.u32 %v363, 7
        %v365 = vsub.s32 0, %v364
        %v366 = vrot.slane %v361, %v365
        %v367 = vlaneseq
        %v368 = vshrl.u32 %v367, 7
        %v369 = vsub.s32 1, %v368
        %v370 = vrot.slane %v361, %v369
        %vm373 = vcmp.lt.f32.partialorder %v366, %v311
        %vm374 = vcmp.lt.f32.partialorder %v370, %v312
        %v375 = vsel %vm373, 1, 0
        %v376 = vsel %vm374, 1, 0
        %v377 = vadd.s32 %v352, %v375
        %v378 = vadd.s32 %v353, %v376
        %vm379 = vcmp.gt.f32.partialorder %v366, %v311
        %vm380 = vcmp.gt.f32.partialorder %v370, %v312
        %v381 = vsel %vm379, 1, 0
        %v382 = vsel %vm380, 1, 0
        %v383 = vadd.s32 %v358, %v381
        %v384 = vadd.s32 %v359, %v382
        %s385 = scalar_lea.vmem [#allocation2], 3
        %v386 = vld [vmem:[%s385] ss:$8 sm:$0x3]
        %v388 = vlaneseq
        %v389 = vshrl.u32 %v388, 7
        %v390 = vsub.s32 0, %v389
        %v391 = vrot.slane %v386, %v390
        %v392 = vlaneseq
        %v393 = vshrl.u32 %v392, 7
        %v394 = vsub.s32 1, %v393
        %v395 = vrot.slane %v386, %v394
        %vm398 = vcmp.lt.f32.partialorder %v391, %v311
        %vm399 = vcmp.lt.f32.partialorder %v395, %v312
        %v400 = vsel %vm398, 1, 0
        %v401 = vsel %vm399, 1, 0
        %v402 = vadd.s32 %v377, %v400
        %v403 = vadd.s32 %v378, %v401
        %vm404 = vcmp.gt.f32.partialorder %v391, %v311
        %vm405 = vcmp.gt.f32.partialorder %v395, %v312
        %v406 = vsel %vm404, 1, 0
        %v407 = vsel %vm405, 1, 0
        %v408 = vadd.s32 %v383, %v406
        %v409 = vadd.s32 %v384, %v407
        %s410 = scalar_lea.vmem [#allocation2], 4
        %v411 = vld [vmem:[%s410] ss:$8 sm:$0x3]
        %v413 = vlaneseq
        %v414 = vshrl.u32 %v413, 7
        %v415 = vsub.s32 0, %v414
        %v416 = vrot.slane %v411, %v415
        %v417 = vlaneseq
        %v418 = vshrl.u32 %v417, 7
        %v419 = vsub.s32 1, %v418
        %v420 = vrot.slane %v411, %v419
        %vm423 = vcmp.lt.f32.partialorder %v416, %v311
        %vm424 = vcmp.lt.f32.partialorder %v420, %v312
        %v425 = vsel %vm423, 1, 0
        %v426 = vsel %vm424, 1, 0
        %v427 = vadd.s32 %v402, %v425
        %v428 = vadd.s32 %v403, %v426
        %vm429 = vcmp.gt.f32.partialorder %v416, %v311
        %vm430 = vcmp.gt.f32.partialorder %v420, %v312
        %v431 = vsel %vm429, 1, 0
        %v432 = vsel %vm430, 1, 0
        %v433 = vadd.s32 %v408, %v431
        %v434 = vadd.s32 %v409, %v432
        %s435 = scalar_lea.vmem [#allocation2], 5
        %v436 = vld [vmem:[%s435] ss:$8 sm:$0x3]
        %v438 = vlaneseq
        %v439 = vshrl.u32 %v438, 7
        %v440 = vsub.s32 0, %v439
        %v441 = vrot.slane %v436, %v440
        %v442 = vlaneseq
        %v443 = vshrl.u32 %v442, 7
        %v444 = vsub.s32 1, %v443
        %v445 = vrot.slane %v436, %v444
        %vm448 = vcmp.lt.f32.partialorder %v441, %v311
        %vm449 = vcmp.lt.f32.partialorder %v445, %v312
        %v450 = vsel %vm448, 1, 0
        %v451 = vsel %vm449, 1, 0
        %v452 = vadd.s32 %v427, %v450
        %v453 = vadd.s32 %v428, %v451
        %vm454 = vcmp.gt.f32.partialorder %v441, %v311
        %vm455 = vcmp.gt.f32.partialorder %v445, %v312
        %v456 = vsel %vm454, 1, 0
        %v457 = vsel %vm455, 1, 0
        %v458 = vadd.s32 %v433, %v456
        %v459 = vadd.s32 %v434, %v457
        %s460 = scalar_lea.vmem [#allocation2], 6
        %v461 = vld [vmem:[%s460] ss:$8 sm:$0x3]
        %v463 = vlaneseq
        %v464 = vshrl.u32 %v463, 7
        %v465 = vsub.s32 0, %v464
        %v466 = vrot.slane %v461, %v465
        %v467 = vlaneseq
        %v468 = vshrl.u32 %v467, 7
        %v469 = vsub.s32 1, %v468
        %v470 = vrot.slane %v461, %v469
        %vm473 = vcmp.lt.f32.partialorder %v466, %v311
        %vm474 = vcmp.lt.f32.partialorder %v470, %v312
        %v475 = vsel %vm473, 1, 0
        %v476 = vsel %vm474, 1, 0
        %v477 = vadd.s32 %v452, %v475
        %v478 = vadd.s32 %v453, %v476
        %vm479 = vcmp.gt.f32.partialorder %v466, %v311
        %vm480 = vcmp.gt.f32.partialorder %v470, %v312
        %v481 = vsel %vm479, 1, 0
        %v482 = vsel %vm480, 1, 0
        %v483 = vadd.s32 %v458, %v481
        %v484 = vadd.s32 %v459, %v482
        %s485 = scalar_lea.vmem [#allocation2], 7
        %v486 = vld [vmem:[%s485] ss:$8 sm:$0x3]
        %v488 = vlaneseq
        %v489 = vshrl.u32 %v488, 7
        %v490 = vsub.s32 0, %v489
        %v491 = vrot.slane %v486, %v490
        %v492 = vlaneseq
        %v493 = vshrl.u32 %v492, 7
        %v494 = vsub.s32 1, %v493
        %v495 = vrot.slane %v486, %v494
        %vm498 = vcmp.lt.f32.partialorder %v491, %v311
        %vm499 = vcmp.lt.f32.partialorder %v495, %v312
        %v500 = vsel %vm498, 1, 0
        %v501 = vsel %vm499, 1, 0
        %v502 = vadd.s32 %v477, %v500
        %v503 = vadd.s32 %v478, %v501
        %vm504 = vcmp.gt.f32.partialorder %v491, %v311
        %vm505 = vcmp.gt.f32.partialorder %v495, %v312
        %v506 = vsel %vm504, 1, 0
        %v507 = vsel %vm505, 1, 0
        %v508 = vadd.s32 %v483, %v506
        %v509 = vadd.s32 %v484, %v507
        %v510 = vsub.s32 8, %v508
        %v511 = vsub.s32 8, %v509
        %vm512 = vcmp.lt.s32.totalorder %v502, 5
        %vm513 = vcmp.lt.s32.totalorder %v503, 5
        %vm514 = vcmp.ge.s32.totalorder %v510, 5
        %vm515 = vcmp.ge.s32.totalorder %v511, 5
        %vm516 = vmand %vm512, %vm514
        %vm517 = vmand %vm513, %vm515
        %v518 = vsel %vm516, %v311, -inf
        %v519 = vsel %vm517, %v312, -inf
        %v520 = vrot.slane %v518, 4
        %v521 = vmax.f32 %v518, %v520
        %v522 = vrot.slane %v521, 2
        %v523 = vmax.f32 %v521, %v522
        %v524 = vrot.slane %v523, 1
        %v525 = vmax.f32 %v523, %v524
        %v526 = vrot.slane %v519, 4
        %v527 = vmax.f32 %v519, %v526
        %v528 = vrot.slane %v527, 2
        %v529 = vmax.f32 %v527, %v528
        %v530 = vrot.slane %v529, 1
        %v531 = vmax.f32 %v529, %v530
        %vm532 = vcmp.lt.f32.partialorder %v311, %v525
        %vm533 = vcmp.lt.f32.partialorder %v312, %v531
        %v534 = vsel %vm532, -inf, %v311
        %v535 = vsel %vm533, -inf, %v312
        %v536 = vrot.slane %v534, 4
        %v537 = vmax.f32 %v534, %v536
        %v538 = vrot.slane %v537, 2
        %v539 = vmax.f32 %v537, %v538
        %v540 = vrot.slane %v539, 1
        %v541 = vmax.f32 %v539, %v540
        %v542 = vrot.slane %v535, 4
        %v543 = vmax.f32 %v535, %v542
        %v544 = vrot.slane %v543, 2
        %v545 = vmax.f32 %v543, %v544
        %v546 = vrot.slane %v545, 1
        %v547 = vmax.f32 %v545, %v546
        %v548 = vsub.f32 %v534, %v541
        %v549 = vsub.f32 %v535, %v547
        %v550 = vmul.f32 %v548, 1.442695
        %v551 = vpow.pop %v550
        %v552 = vmul.f32 %v549, 1.442695
        %v553 = vpow.pop %v552
        %v554 = vrot.slane %v551, 4
        %v555 = vadd.f32 %v551, %v554
        %v556 = vrot.slane %v555, 2
        %v557 = vadd.f32 %v555, %v556
        %v558 = vrot.slane %v557, 1
        %v559 = vadd.f32 %v557, %v558
        %v560 = vrot.slane %v553, 4
        %v561 = vadd.f32 %v553, %v560
        %v562 = vrot.slane %v561, 2
        %v563 = vadd.f32 %v561, %v562
        %v564 = vrot.slane %v563, 1
        %v565 = vadd.f32 %v563, %v564
        %v566 = vrcp.pop %v559
        %v567 = vrcp.pop %v565
        %v568 = vmul.f32 %v566, %v233
        %v569 = vmul.f32 %v567, %v234
        %v570 = vmul.f32 %v551, %v568
        %v571 = vmul.f32 %v553, %v569
        %572 = vmatprep.subr.mxu0 %v198
        %573 = vmatpush1.xpose.msra.mxu0 %v197
        %574 = vmatprep.subr.mxu0 %v200
        %575 = vmatpush1.xpose.msra.mxu0 %v199
        %576 = vmatprep.subr.mxu0 %v202
        %577 = vmatpush1.xpose.msra.mxu0 %v201
        %578 = vmatprep.subr.mxu0 %v204
        %579 = vmatpush1.xpose.msra.mxu0 %v203
        %580 = vmatprep.subr.mxu0 0.0
        %581 = vmatpush1.xpose.msra.mxu0 0.0
        %582 = vmatprep.subr.mxu0 0.0
        %583 = vmatpush1.xpose.msra.mxu0 0.0
        %584 = vmatprep.subr.mxu0 0.0
        %585 = vmatpush1.xpose.msra.mxu0 0.0
        %586 = vmatprep.subr.mxu0 0.0
        %587 = vmatpush1.xpose.msra.mxu0 0.0
        %588 = vmatprep.subr.mxu0 0.0
        %589 = vmatpush1.xpose.msra.mxu0 0.0
        %590 = vmatprep.subr.mxu0 0.0
        %591 = vmatpush1.xpose.msra.mxu0 0.0
        %592 = vmatprep.subr.mxu0 0.0
        %593 = vmatpush1.xpose.msra.mxu0 0.0
        %594 = vmatprep.subr.mxu0 0.0
        %595 = vmatpush1.xpose.msra.mxu0 0.0
        %596 = vmatprep.subr.mxu0 0.0
        %597 = vmatpush1.xpose.msra.mxu0 0.0
        %598 = vmatprep.subr.mxu0 0.0
        %599 = vmatpush1.xpose.msra.mxu0 0.0
        %600 = vmatprep.subr.mxu0 0.0
        %601 = vmatpush1.xpose.msra.mxu0 0.0
        %602 = vmatprep.subr.mxu0 0.0
        %603 = vmatpush1.xpose.msra.mxu0 0.0
        %604 = vmatprep.subr.mxu0 0.0
        %605 = vmatpush1.xpose.msra.mxu0 0.0
        %606 = vmatprep.subr.mxu0 0.0
        %607 = vmatpush1.xpose.msra.mxu0 0.0
        %608 = vmatprep.subr.mxu0 0.0
        %609 = vmatpush1.xpose.msra.mxu0 0.0
        %610 = vmatprep.subr.mxu0 0.0
        %611 = vmatpush1.xpose.msra.mxu0 0.0
        %612 = vmatprep.subr.mxu0 0.0
        %613 = vmatpush1.xpose.msra.mxu0 0.0
        %614 = vmatprep.subr.mxu0 0.0
        %615 = vmatpush1.xpose.msra.mxu0 0.0
        %616 = vmatprep.subr.mxu0 0.0
        %617 = vmatpush1.xpose.msra.mxu0 0.0
        %618 = vmatprep.subr.mxu0 0.0
        %619 = vmatpush1.xpose.msra.mxu0 0.0
        %620 = vmatprep.subr.mxu0 0.0
        %621 = vmatpush1.xpose.msra.mxu0 0.0
        %622 = vmatprep.subr.mxu0 0.0
        %623 = vmatpush1.xpose.msra.mxu0 0.0
        %624 = vmatprep.subr.mxu0 0.0
        %625 = vmatpush1.xpose.msra.mxu0 0.0
        %626 = vmatprep.subr.mxu0 0.0
        %627 = vmatpush1.xpose.msra.mxu0 0.0
        %628 = vmatprep.subr.mxu0 0.0
        %629 = vmatpush1.xpose.msra.mxu0 0.0
        %630 = vmatprep.subr.mxu0 0.0
        %631 = vmatpush1.xpose.msra.mxu0 0.0
        %632 = vmatprep.subr.mxu0 0.0
        %633 = vmatpush1.xpose.msra.mxu0 0.0
        %634 = vmatprep.subr.mxu0 0.0
        %635 = vmatpush1.xpose.msra.mxu0 0.0
        %636 = vmatprep.mubr.f32.mxu0 %v571
        %637 = vmatmul.mubr.f32.gmra.mrb[0].mxu0 %v570
        %v638 = vpop.f32.mrb[0].mxu0
        %v639 = vadd.f32 0.0, %v638
        %v640 = vpop.f32.mrb[0].mxu0
        %641 = vdwg.mxu0
        %v642 = vld [vmem:[%s190] sm:$0xff]
        %v643 = vadd.f32 %v642, %v639
        %644 = vst.msk [vmem:[%s190] sm:$0xff] %vm236, %v643
        %s645 = sand.u32 %s89, 1
        %s646 = scalar_lea.sflag [#allocation5], %s645
        %s647 = sand.u32 %s89, 1
        %s648 = smul.addr %s647, 8
        %s649 = scalar_lea.vmem [#allocation8], %s648
        // Predicated region
        $region41: #{tpu_custom_call.1} parent=27 // pred_check
          %p650 = pneg %p99
        $region42: #{tpu_custom_call.1} parent=27 // pred_check_branch
          %652 = sbr.rel (%p650) target = $region44
        $region43: #{tpu_custom_call.1} parent=27 // pred_region
          %s654 = ssub.s32 128, 128
          %655 = vsyncadd %s646, %s654
          %s656 = smul.addr %s24, 128
          %s657 = scalar_lea.hbm %s2, %s656
          %s659 = sshll.u32 %s649, 4
          %s660 = int_to_ptr.vmem [resolvable:$true] %s659
          %662 = dma.vmem_to_hbm [thread:$0]  %s660, 128, %s657, %s646
        $region44: #{tpu_custom_call.1} parent=27 // pred_fallthru
          _
      $region28: #{tpu_custom_call.1} parent=5 // pred_fallthru
        _
      %p663 = scmp.le.s32.totalorder 2, %s15
      // Predicated region
      $region45: #{tpu_custom_call.1} parent=5 // pred_check
        %p664 = pneg %p663
      $region46: #{tpu_custom_call.1} parent=5 // pred_check_branch
        %666 = sbr.rel (%p664) target = $region48
      $region47: #{tpu_custom_call.1} parent=5 // pred_region
        %s667 = ssub.s32 %s15, 2
        // Predicated region
        $region49: #{tpu_custom_call.1} parent=47 // pred_check
          %p668 = pneg %p105
        $region50: #{tpu_custom_call.1} parent=47 // pred_check_branch
          %670 = sbr.rel (%p668) target = $region52
        $region51: #{tpu_custom_call.1} parent=47 // pred_region
          %s671 = sand.u32 %s90, 1
          %s672 = scalar_lea.sflag [#allocation5], %s671
          %s673 = sand.u32 %s90, 1
          %s674 = smul.addr %s673, 8
          %s675 = scalar_lea.vmem [#allocation8], %s674
          %676 = dma.done %s672, 128
        $region52: #{tpu_custom_call.1} parent=47 // pred_fallthru
          _
      $region48: #{tpu_custom_call.1} parent=5 // pred_fallthru
        _
    $region6: #{tpu_custom_call.1} parent=1 // loop_footer
      %s19 = sadd.s32 1, %s15
    $region7: #{tpu_custom_call.1} parent=1 // loop_footer_branch
      %14 = sbr.rel target = $region3
    $region8: #{tpu_custom_call.1} parent=1 // loop_exit
      _
    %677 = vsyncpa [#allocation4], 1
    %s678 = scalar_lea.sflag [#allocation4], 1
    %679 = vsyncpa %s678, 1
    %680 = vsyncpa [#allocation7], 1
    %681 = vsyncpa [#allocation5], 1
    %s682 = scalar_lea.sflag [#allocation5], 1
    %683 = vsyncpa %s682, 1

</llo_original>
